<compile_context>
chip_gen: v7x
topology: tpu7x:2x2x1
jax: 0.10.0
libtpu: 0.0.40
codegen_flags: <defaults>
</compile_context>

<pallas_src>
import jax
import jax.numpy as jnp
from jax.experimental import pallas as pl
from jax.experimental.pallas import tpu as pltpu

_H3 = 64       # true layer-3 width
_H3P = 128     # lane-dense padded layer-3 width


def _make_kernel(use_vpu_head: bool):
    def kernel(x_ref, w2_ref, b2_ref, w3_ref, b3_ref, w4_ref, b4_ref, o_ref):
        x = x_ref[...]                                           # [tb, H] bf16

        # linear2 + relu2  (MXU, bf16 in / f32 acc)
        h = jnp.dot(x, w2_ref[...], preferred_element_type=jnp.float32)
        h = jnp.maximum(h + b2_ref[...], 0.0)                    # [tb, 256] f32

        # linear3 + relu3  (MXU, lane-dense: output padded to 128 lanes)
        h = jnp.dot(h.astype(jnp.bfloat16), w3_ref[...],
                    preferred_element_type=jnp.float32)
        h = jnp.maximum(h + b3_ref[...], 0.0)                    # [tb, 128] f32
        # padded lanes 64..127 are exactly zero (zero weights + zero bias + ReLU)

        # linear4
        if use_vpu_head:
            # output_dim == 1: VPU multiply + XLU lane reduce; skip a third,
            # badly under-filled MXU call. Padded lanes contribute 0.
            z = jnp.sum(h * w4_ref[...], axis=-1, keepdims=True) + b4_ref[...]
        else:
            z = jnp.dot(h.astype(jnp.bfloat16), w4_ref[...],
                        preferred_element_type=jnp.float32) + b4_ref[...]

        # sigmoid(z) = 0.5 * (tanh(z/2) + 1)  -- single EUP op, numerically stable.
        o_ref[...] = (0.5 * (jnp.tanh(0.5 * z) + 1.0)).astype(o_ref.dtype)

    return kernel


def _round_up(a, m):
    return ((a + m - 1) // m) * m


def discriminator_forward(x, w2, b2, w3, b3, w4, b4):
    """x: [B, hidden_dim]; w*: [in, out]; b*: [out]. Returns sigmoid output [B, output_dim]."""
    B, H = x.shape
    out_dim = w4.shape[1]

    # ---- one-time operand prep (wrapper-side, outside the kernel) ----
    w2b = w2.astype(jnp.bfloat16)                                          # [H, 256]
    w3p = jnp.zeros((256, _H3P), jnp.float32).at[:, :_H3].set(w3)          # pad 64->128
    w3p = w3p.astype(jnp.bfloat16)
    b2r = b2.reshape(1, -1).astype(jnp.float32)                            # [1, 256]
    b3p = jnp.zeros((1, _H3P), jnp.float32).at[:, :_H3].set(b3.reshape(1, -1))
    b4r = b4.reshape(1, -1).astype(jnp.float32)                            # [1, out]

    use_vpu_head = (out_dim == 1)
    if use_vpu_head:
        # w4 [64,1] -> lane-dense row [1,128] (extra lanes multiply zeros from ReLU pad)
        w4k = jnp.zeros((1, _H3P), jnp.float32).at[:, :_H3].set(w4.reshape(1, -1))
    else:
        w4k = jnp.zeros((_H3P, out_dim), jnp.float32).at[:_H3, :].set(w4)
        w4k = w4k.astype(jnp.bfloat16)

    # Batch tiling: weights stay VMEM-resident (constant index_maps); batch axis
    # is "parallel" so big batches can use both v7x TensorCores.
    block_b = min(512, _round_up(B, 8))
    Bp = _round_up(B, block_b)
    xb = x.astype(jnp.bfloat16)
    if Bp != B:
        xb = jnp.pad(xb, ((0, Bp - B), (0, 0)))
    grid = (Bp // block_b,)

    const = lambda a: pl.BlockSpec(a.shape, lambda i: (0,) * a.ndim)

    out = pl.pallas_call(
        _make_kernel(use_vpu_head),
        out_shape=jax.ShapeDtypeStruct((Bp, out_dim), jnp.float32),
        grid=grid,
        in_specs=[
            pl.BlockSpec((block_b, H), lambda i: (i, 0)),
            const(w2b), const(b2r), const(w3p), const(b3p), const(w4k), const(b4r),
        ],
        out_specs=pl.BlockSpec((block_b, out_dim), lambda i: (i, 0)),
        compiler_params=pltpu.CompilerParams(
            dimension_semantics=("parallel",)),
    )(xb, w2b, b2r, w3p, b3p, w4k, b4r)

    return out[:B]


def init_params(key, hidden_dim, output_dim):
    """Deterministic synthetic parameters matching nn.Linear shapes.

    nn.Linear(in, out) has weight [out, in], bias [out]; we store weight
    transposed as [in, out] for the kernel's row-major matmul.
    """
    ks = jax.random.split(key, 6)

    def lin(kw, kb, fan_in, fan_out):
        bound = 1.0 / jnp.sqrt(fan_in)
        w = jax.random.uniform(kw, (fan_in, fan_out), jnp.float32, -bound, bound)
        b = jax.random.uniform(kb, (fan_out,), jnp.float32, -bound, bound)
        return w, b

    w2, b2 = lin(ks[0], ks[1], hidden_dim, 256)
    w3, b3 = lin(ks[2], ks[3], 256, _H3)
    w4, b4 = lin(ks[4], ks[5], _H3, output_dim)
    return w2, b2, w3, b3, w4, b4


def reference_forward_f32(x, w2, b2, w3, b3, w4, b4):
    """Pure-f32 reference (matches the PyTorch module exactly)."""
    h = jnp.maximum(x @ w2 + b2, 0.0)
    h = jnp.maximum(h @ w3 + b3, 0.0)
    return jax.nn.sigmoid(h @ w4 + b4)


def reference_forward_matched(x, w2, b2, w3, b3, w4, b4):
    """Reference using the same bf16-input / f32-accumulate precision as the kernel."""
    h = jnp.dot(x.astype(jnp.bfloat16), w2.astype(jnp.bfloat16),
                preferred_element_type=jnp.float32)
    h = jnp.maximum(h + b2, 0.0)
    h = jnp.dot(h.astype(jnp.bfloat16), w3.astype(jnp.bfloat16),
                preferred_element_type=jnp.float32)
    h = jnp.maximum(h + b3, 0.0)
    z = h @ w4 + b4
    return 0.5 * (jnp.tanh(0.5 * z) + 1.0)


if __name__ == "__main__":
    key = jax.random.PRNGKey(0)
    k_in, k_par = jax.random.split(key)

    batch, hidden_dim, output_dim = 8, 32, 1
    x = jax.random.normal(k_in, (batch, hidden_dim), jnp.float32)
    params = init_params(k_par, hidden_dim, output_dim)

    out = discriminator_forward(x, *params)
    out = jax.block_until_ready(out)
    assert out.shape == (batch, output_dim)

    # Tight check against a precision-matched reference (same bf16 MXU inputs).
    ref_m = reference_forward_matched(x, *params)
    assert jnp.allclose(out, ref_m, atol=5e-3, rtol=5e-3), "mismatch vs matched reference"

    # Loose sanity check against the full-f32 PyTorch-equivalent reference
    # (bf16 weights => relaxed tolerance).
    ref = reference_forward_f32(x, *params)
    assert jnp.allclose(out, ref, atol=3e-2, rtol=3e-2), "mismatch vs f32 reference"

    print("KERNEL_OK")
</pallas_src>

<mosaic_0001>
module attributes {stable_mosaic.version = 11 : i64} {
  func.func @kernel(%arg0: i32, %arg1: memref<8x32xbf16, #tpu.memory_space<vmem>>, %arg2: memref<32x256xbf16, #tpu.memory_space<vmem>>, %arg3: memref<1x256xf32, #tpu.memory_space<vmem>>, %arg4: memref<256x128xbf16, #tpu.memory_space<vmem>>, %arg5: memref<1x128xf32, #tpu.memory_space<vmem>>, %arg6: memref<1x128xf32, #tpu.memory_space<vmem>>, %arg7: memref<1x1xf32, #tpu.memory_space<vmem>>, %arg8: memref<8x1xf32, #tpu.memory_space<vmem>>) attributes {dimension_semantics = [#tpu.dimension_semantics<parallel>], iteration_bounds = array<i64: 1>, scalar_prefetch = 0 : i64, scratch_operands = 0 : i64, tpu.core_type = #tpu.core_type<tc>, window_params = [{transform_indices = @transform_0, window_bounds = array<i64: 8, 32>}, {pipeline_mode = #tpu.pipeline_mode<synchronous>, transform_indices = @transform_1, window_bounds = array<i64: 32, 256>}, {pipeline_mode = #tpu.pipeline_mode<synchronous>, transform_indices = @transform_2, window_bounds = array<i64: 1, 256>}, {pipeline_mode = #tpu.pipeline_mode<synchronous>, transform_indices = @transform_3, window_bounds = array<i64: 256, 128>}, {pipeline_mode = #tpu.pipeline_mode<synchronous>, transform_indices = @transform_4, window_bounds = array<i64: 1, 128>}, {pipeline_mode = #tpu.pipeline_mode<synchronous>, transform_indices = @transform_5, window_bounds = array<i64: 1, 128>}, {pipeline_mode = #tpu.pipeline_mode<synchronous>, transform_indices = @transform_6, window_bounds = array<i64: 1, 1>}, {transform_indices = @transform_7, window_bounds = array<i64: 8, 1>}]} {
    %c0 = arith.constant 0 : index
    %c0_0 = arith.constant 0 : index
    %0 = vector.load %arg1[%c0, %c0_0] : memref<8x32xbf16, #tpu.memory_space<vmem>>, vector<8x32xbf16>
    %c0_1 = arith.constant 0 : index
    %c0_2 = arith.constant 0 : index
    %1 = vector.load %arg2[%c0_1, %c0_2] : memref<32x256xbf16, #tpu.memory_space<vmem>>, vector<32x256xbf16>
    %cst = arith.constant dense<0.000000e+00> : vector<8x256xf32>
    %2 = tpu.matmul %0, %1, %cst {dimension_numbers = #tpu.dot_dimension_numbers<[1], [0], [0], [1], [0, 0, 1, 1], [], []>} : vector<8x32xbf16>, vector<32x256xbf16>, vector<8x256xf32> -> vector<8x256xf32>
    %c0_3 = arith.constant 0 : index
    %c0_4 = arith.constant 0 : index
    %3 = vector.load %arg3[%c0_3, %c0_4] : memref<1x256xf32, #tpu.memory_space<vmem>>, vector<1x256xf32>
    %4 = vector.broadcast %3 : vector<1x256xf32> to vector<8x256xf32>
    %5 = arith.addf %2, %4 : vector<8x256xf32>
    %cst_5 = arith.constant 0.000000e+00 : f32
    %6 = vector.broadcast %cst_5 : f32 to vector<8x256xf32>
    %7 = arith.maximumf %5, %6 : vector<8x256xf32>
    %8 = arith.truncf %7 : vector<8x256xf32> to vector<8x256xbf16>
    %c0_6 = arith.constant 0 : index
    %c0_7 = arith.constant 0 : index
    %9 = vector.load %arg4[%c0_6, %c0_7] : memref<256x128xbf16, #tpu.memory_space<vmem>>, vector<256x128xbf16>
    %cst_8 = arith.constant dense<0.000000e+00> : vector<8x128xf32>
    %10 = tpu.matmul %8, %9, %cst_8 {dimension_numbers = #tpu.dot_dimension_numbers<[1], [0], [0], [1], [0, 0, 1, 1], [], []>} : vector<8x256xbf16>, vector<256x128xbf16>, vector<8x128xf32> -> vector<8x128xf32>
    %c0_9 = arith.constant 0 : index
    %c0_10 = arith.constant 0 : index
    %11 = vector.load %arg5[%c0_9, %c0_10] : memref<1x128xf32, #tpu.memory_space<vmem>>, vector<1x128xf32>
    %12 = vector.broadcast %11 : vector<1x128xf32> to vector<8x128xf32>
    %13 = arith.addf %10, %12 : vector<8x128xf32>
    %cst_11 = arith.constant 0.000000e+00 : f32
    %14 = vector.broadcast %cst_11 : f32 to vector<8x128xf32>
    %15 = arith.maximumf %13, %14 : vector<8x128xf32>
    %c0_12 = arith.constant 0 : index
    %c0_13 = arith.constant 0 : index
    %16 = vector.load %arg6[%c0_12, %c0_13] : memref<1x128xf32, #tpu.memory_space<vmem>>, vector<1x128xf32>
    %17 = vector.broadcast %16 : vector<1x128xf32> to vector<8x128xf32>
    %18 = arith.mulf %15, %17 : vector<8x128xf32>
    %cst_14 = arith.constant dense<0.000000e+00> : vector<8xf32>
    %19 = vector.multi_reduction <add>, %18, %cst_14 [1] : vector<8x128xf32> to vector<8xf32>
    %20 = vector.shape_cast %19 : vector<8xf32> to vector<8x1xf32>
    %c0_15 = arith.constant 0 : index
    %c0_16 = arith.constant 0 : index
    %21 = vector.load %arg7[%c0_15, %c0_16] : memref<1x1xf32, #tpu.memory_space<vmem>>, vector<1x1xf32>
    %22 = vector.broadcast %21 : vector<1x1xf32> to vector<8x1xf32>
    %23 = arith.addf %20, %22 : vector<8x1xf32>
    %cst_17 = arith.constant 5.000000e-01 : f32
    %24 = vector.broadcast %cst_17 : f32 to vector<8x1xf32>
    %25 = arith.mulf %24, %23 : vector<8x1xf32>
    %26 = math.tanh %25 : vector<8x1xf32>
    %cst_18 = arith.constant 1.000000e+00 : f32
    %27 = vector.broadcast %cst_18 : f32 to vector<8x1xf32>
    %28 = arith.addf %26, %27 : vector<8x1xf32>
    %cst_19 = arith.constant 5.000000e-01 : f32
    %29 = vector.broadcast %cst_19 : f32 to vector<8x1xf32>
    %30 = arith.mulf %29, %28 : vector<8x1xf32>
    %c0_20 = arith.constant 0 : index
    %c0_21 = arith.constant 0 : index
    %31 = vector.load %arg8[%c0_20, %c0_21] : memref<8x1xf32, #tpu.memory_space<vmem>>, vector<8x1xf32>
    tpu.vector_store %arg8[%c0_20, %c0_21], %30 {strides = array<i32>} : memref<8x1xf32, #tpu.memory_space<vmem>>, vector<8x1xf32>,
    return
  }
  func.func @transform_0(%arg0: i32) -> (i32, i32) {
    %c0_i32 = arith.constant 0 : i32
    %c0_i32_0 = arith.constant 0 : i32
    return %arg0, %c0_i32 : i32, i32
  }
  func.func @transform_1(%arg0: i32) -> (i32, i32) {
    %c0_i32 = arith.constant 0 : i32
    %c0_i32_0 = arith.constant 0 : i32
    %c0_i32_1 = arith.constant 0 : i32
    return %c0_i32, %c0_i32_0 : i32, i32
  }
  func.func @transform_2(%arg0: i32) -> (i32, i32) {
    %c0_i32 = arith.constant 0 : i32
    %c0_i32_0 = arith.constant 0 : i32
    %c0_i32_1 = arith.constant 0 : i32
    return %c0_i32, %c0_i32_0 : i32, i32
  }
  func.func @transform_3(%arg0: i32) -> (i32, i32) {
    %c0_i32 = arith.constant 0 : i32
    %c0_i32_0 = arith.constant 0 : i32
    %c0_i32_1 = arith.constant 0 : i32
    return %c0_i32, %c0_i32_0 : i32, i32
  }
  func.func @transform_4(%arg0: i32) -> (i32, i32) {
    %c0_i32 = arith.constant 0 : i32
    %c0_i32_0 = arith.constant 0 : i32
    %c0_i32_1 = arith.constant 0 : i32
    return %c0_i32, %c0_i32_0 : i32, i32
  }
  func.func @transform_5(%arg0: i32) -> (i32, i32) {
    %c0_i32 = arith.constant 0 : i32
    %c0_i32_0 = arith.constant 0 : i32
    %c0_i32_1 = arith.constant 0 : i32
    return %c0_i32, %c0_i32_0 : i32, i32
  }
  func.func @transform_6(%arg0: i32) -> (i32, i32) {
    %c0_i32 = arith.constant 0 : i32
    %c0_i32_0 = arith.constant 0 : i32
    %c0_i32_1 = arith.constant 0 : i32
    return %c0_i32, %c0_i32_0 : i32, i32
  }
  func.func @transform_7(%arg0: i32) -> (i32, i32) {
    %c0_i32 = arith.constant 0 : i32
    %c0_i32_0 = arith.constant 0 : i32
    return %arg0, %c0_i32 : i32, i32
  }
}

</mosaic_0001>

<llo_original>
// kernel: tpu_custom_call.1
$region0: #{tpu_custom_call.1}
  #allocation0 [shape = 'u32[]', space=smem, size = 0x4, offset = 0x4, fixed_abs, tag = 'smem constant byte address 0x4 - core index']
  #allocation1 [shape = 'u32[144,128]{1,0:T(1,128)}', space=vmem, size = 0x12000, scoped, tag = 'internal scratch']
  #allocation2 [shape = 'f32[1,1]{1,0:T(1,128)S(1)}', space=vmem, size = 0x200, scoped, tag = 'scoped memory for tpu_custom_call.1']
  %s0 = inlined_call_operand.hbm [shape: bf16[8,32], index: 0, kind: input, shape index: {}]
  %s1 = inlined_call_operand.hbm [shape: bf16[32,256], index: 1, kind: input, shape index: {}]
  %s2 = inlined_call_operand.vmem [shape: f32[1,256], index: 2, kind: input, shape index: {}]
  %s3 = inlined_call_operand.hbm [shape: bf16[256,128], index: 3, kind: input, shape index: {}]
  %s4 = inlined_call_operand.vmem [shape: f32[1,128], index: 4, kind: input, shape index: {}]
  %s5 = inlined_call_operand.vmem [shape: f32[1,128], index: 5, kind: input, shape index: {}]
  %s6 = inlined_call_operand.<no memory space> [shape: f32[1,1], index: 6, kind: input, shape index: {}]
  %s7 = inlined_call_operand.vmem [shape: f32[8,1], index: 7, kind: output, shape index: {}]
  %s8 = sld [smem:[#allocation0]]
  $region50: #{tpu_custom_call.1} parent=0
    _
  %s10 = ssub.s32 1, %s8
  %s11 = scalar_select 0, %s10, %s8
  %v12 = vstv %s6
  %13 = vst [vmem:[#allocation2] sm:$0x1] %v12
  $region1: #{tpu_custom_call.1} parent=0
    #allocation3 [shape = 'u8[2048]{0}', space=vmem, size = 0x800, scoped, tag = 'input window, operand 0, single buffered']
    #allocation4 [shape = 's32[1]{0}', space=sflag, size = 0x4, scoped, tag = 'scoped memory for tpu_custom_call.1']
    #allocation5 [shape = 'u8[16384]{0}', space=vmem, size = 0x4000, scoped, tag = 'input window, operand 1, single buffered']
    #allocation6 [shape = 's32[1]{0}', space=sflag, size = 0x4, scoped, tag = 'scoped memory for tpu_custom_call.1']
    #allocation7 [shape = 'u8[65536]{0}', space=vmem, size = 0x10000, scoped, tag = 'input window, operand 3, single buffered']
    %14 = vsyncpa [#allocation4], 0
    %15 = vsyncpa [#allocation6], 0
    // Predicated region
    $region2: #{tpu_custom_call.1} parent=1 // pred_check
      _
    $region3: #{tpu_custom_call.1} parent=1 // pred_check_branch
      %17 = sbr.rel (0) target = $region5
    $region4: #{tpu_custom_call.1} parent=1 // pred_region
      %s19 = ssub.s32 64, 64
      %20 = vsyncadd [#allocation4], %s19
      %s22 = sshll.u32 [#allocation3], 4
      %s23 = int_to_ptr.vmem [resolvable:$true] %s22
      %25 = dma.hbm_to_vmem [thread:$0]  %s0, 64, %s23, [#allocation4]
    $region5: #{tpu_custom_call.1} parent=1 // pred_fallthru
      _
    // Predicated region
    $region6: #{tpu_custom_call.1} parent=1 // pred_check
      _
    $region7: #{tpu_custom_call.1} parent=1 // pred_check_branch
      %27 = sbr.rel (0) target = $region9
    $region8: #{tpu_custom_call.1} parent=1 // pred_region
      %s29 = ssub.s32 512, 512
      %30 = vsyncadd [#allocation6], %s29
      %s31 = sshll.u32 [#allocation5], 4
      %s32 = int_to_ptr.vmem [resolvable:$true] %s31
      %37 = dma.hbm_to_vmem [thread:$0]  %s1, 512, %s32, [#allocation6], 128, 128, 8
    $region9: #{tpu_custom_call.1} parent=1 // pred_fallthru
      _
    // Predicated region
    $region10: #{tpu_custom_call.1} parent=1 // pred_check
      _
    $region11: #{tpu_custom_call.1} parent=1 // pred_check_branch
      %39 = sbr.rel (0) target = $region13
    $region12: #{tpu_custom_call.1} parent=1 // pred_region
      _
    $region13: #{tpu_custom_call.1} parent=1 // pred_fallthru
      _
    // Predicated region
    $region14: #{tpu_custom_call.1} parent=1 // pred_check
      _
    $region15: #{tpu_custom_call.1} parent=1 // pred_check_branch
      %41 = sbr.rel (0) target = $region17
    $region16: #{tpu_custom_call.1} parent=1 // pred_region
      %s43 = ssub.s32 2048, 2048
      %44 = vsyncadd [#allocation6], %s43
      %s45 = sshll.u32 [#allocation7], 4
      %s46 = int_to_ptr.vmem [resolvable:$true] %s45
      %51 = dma.hbm_to_vmem [thread:$0]  %s3, 2048, %s46, [#allocation6], 64, 64, 4
    $region17: #{tpu_custom_call.1} parent=1 // pred_fallthru
      _
    // Predicated region
    $region18: #{tpu_custom_call.1} parent=1 // pred_check
      _
    $region19: #{tpu_custom_call.1} parent=1 // pred_check_branch
      %53 = sbr.rel (0) target = $region21
    $region20: #{tpu_custom_call.1} parent=1 // pred_region
      _
    $region21: #{tpu_custom_call.1} parent=1 // pred_fallthru
      _
    // Predicated region
    $region22: #{tpu_custom_call.1} parent=1 // pred_check
      _
    $region23: #{tpu_custom_call.1} parent=1 // pred_check_branch
      %55 = sbr.rel (0) target = $region25
    $region24: #{tpu_custom_call.1} parent=1 // pred_region
      _
    $region25: #{tpu_custom_call.1} parent=1 // pred_fallthru
      _
    // Predicated region
    $region26: #{tpu_custom_call.1} parent=1 // pred_check
      _
    $region27: #{tpu_custom_call.1} parent=1 // pred_check_branch
      %57 = sbr.rel (0) target = $region29
    $region28: #{tpu_custom_call.1} parent=1 // pred_region
      _
    $region29: #{tpu_custom_call.1} parent=1 // pred_fallthru
      _
    // Predicated region
    $region30: #{tpu_custom_call.1} parent=1 // pred_check
      _
    $region31: #{tpu_custom_call.1} parent=1 // pred_check_branch
      %59 = sbr.rel (0) target = $region33
    $region32: #{tpu_custom_call.1} parent=1 // pred_region
      %60 = dma.done [#allocation4], 64
    $region33: #{tpu_custom_call.1} parent=1 // pred_fallthru
      _
    // Predicated region
    $region34: #{tpu_custom_call.1} parent=1 // pred_check
      _
    $region35: #{tpu_custom_call.1} parent=1 // pred_check_branch
      %62 = sbr.rel (0) target = $region37
    $region36: #{tpu_custom_call.1} parent=1 // pred_region
      %63 = dma.done [#allocation6], 512
    $region37: #{tpu_custom_call.1} parent=1 // pred_fallthru
      _
    // Predicated region
    $region38: #{tpu_custom_call.1} parent=1 // pred_check
      _
    $region39: #{tpu_custom_call.1} parent=1 // pred_check_branch
      %65 = sbr.rel (0) target = $region41
    $region40: #{tpu_custom_call.1} parent=1 // pred_region
      %66 = dma.done [#allocation6], 2048
    $region41: #{tpu_custom_call.1} parent=1 // pred_fallthru
      _
    %v68 = vld [vmem:[#allocation3] sm:$0xf]
    %v69 = vld [vmem:[#allocation5] sm:$0xff]
    %v70 = vld [vmem:[#allocation5 + $0x8] sm:$0xff]
    %v71 = vld [vmem:[#allocation5 + $0x10] sm:$0xff]
    %v72 = vld [vmem:[#allocation5 + $0x18] sm:$0xff]
    %v73 = vld [vmem:[%s2] sm:$0x3]
    %v75 = vlaneseq
    %v76 = vshrl.u32 %v75, 7
    %v77 = vsub.s32 0, %v76
    %v78 = vrot.slane %v73, %v77
    %v79 = vlaneseq
    %v80 = vshrl.u32 %v79, 7
    %v81 = vsub.s32 1, %v80
    %v82 = vrot.slane %v73, %v81
    %v89 = vunpack.c.l.b16 %v69
    %v90 = vunpack.c.h.b16 %v69
    %v91 = vunpack.c.l.b16 %v70
    %v92 = vunpack.c.h.b16 %v70
    %v93 = vunpack.c.l.b16 %v71
    %v94 = vunpack.c.h.b16 %v71
    %v95 = vunpack.c.l.b16 %v72
    %v96 = vunpack.c.h.b16 %v72
    %v97 = vpack.c.b16 %v91, %v89
    %v98 = vpack.c.b16 %v92, %v90
    %v99 = vpack.c.b16 %v95, %v93
    %v100 = vpack.c.b16 %v96, %v94
    %vm105 = vcmask 261120
    %v107 = vsel %vm105, %v68, 0
    %109 = vmatprep.subr.bf16.mxu0 %v98
    %110 = vmatpush1.bf16.msra.mxu0 %v97
    %111 = vmatprep.subr.bf16.mxu0 %v100
    %112 = vmatpush1.bf16.msra.mxu0 %v99
    %113 = vmatprep.subr.bf16.mxu0 0
    %114 = vmatpush1.bf16.msra.mxu0 0
    %115 = vmatprep.subr.bf16.mxu0 0
    %116 = vmatpush1.bf16.msra.mxu0 0
    %117 = vmatprep.subr.bf16.mxu0 0
    %118 = vmatpush1.bf16.msra.mxu0 0
    %119 = vmatprep.subr.bf16.mxu0 0
    %120 = vmatpush1.bf16.msra.mxu0 0
    %121 = vmatprep.subr.bf16.mxu0 0
    %122 = vmatpush1.bf16.msra.mxu0 0
    %123 = vmatprep.subr.bf16.mxu0 0
    %124 = vmatpush1.bf16.msra.mxu0 0
    %125 = vmatprep.subr.bf16.mxu0 0
    %126 = vmatpush1.bf16.msra.mxu0 0
    %127 = vmatprep.subr.bf16.mxu0 0
    %128 = vmatpush1.bf16.msra.mxu0 0
    %129 = vmatprep.subr.bf16.mxu0 0
    %130 = vmatpush1.bf16.msra.mxu0 0
    %131 = vmatprep.subr.bf16.mxu0 0
    %132 = vmatpush1.bf16.msra.mxu0 0
    %133 = vmatprep.subr.bf16.mxu0 0
    %134 = vmatpush1.bf16.msra.mxu0 0
    %135 = vmatprep.subr.bf16.mxu0 0
    %136 = vmatpush1.bf16.msra.mxu0 0
    %137 = vmatprep.subr.bf16.mxu0 0
    %138 = vmatpush1.bf16.msra.mxu0 0
    %139 = vmatprep.subr.bf16.mxu0 0
    %140 = vmatpush1.bf16.msra.mxu0 0
    %141 = vmatprep.mubr.bf16.mxu0 0
    %142 = vmatmul.mubr.bf16.gmra.mrb[0].mxu0 %v107
    %v143 = vpop.f32.mrb[0].mxu0
    %v144 = vadd.f32 %v78, %v143
    %v145 = vpop.f32.mrb[0].mxu0
    %v146 = vadd.f32 %v82, %v145
    %v147 = vpop.f32.mrb[0].mxu0
    %v148 = vpop.f32.mrb[0].mxu0
    %149 = vdwg.mxu0
    %v150 = vmax.f32 %v144, 0.0
    %v151 = vmax.f32 %v146, 0.0
    %v152 = vpack.c.bf16 %v150, %v150
    %v153 = vpack.c.bf16 %v151, %v151
    %v154 = vld [vmem:[#allocation7] sm:$0xf]
    %v155 = vld [vmem:[#allocation7 + $0x4] sm:$0xf]
    %v156 = vld [vmem:[#allocation7 + $0x8] sm:$0xf]
    %v157 = vld [vmem:[#allocation7 + $0xc] sm:$0xf]
    %v158 = vld [vmem:[#allocation7 + $0x10] sm:$0xf]
    %v159 = vld [vmem:[#allocation7 + $0x14] sm:$0xf]
    %v160 = vld [vmem:[#allocation7 + $0x18] sm:$0xf]
    %v161 = vld [vmem:[#allocation7 + $0x1c] sm:$0xf]
    %v162 = vld [vmem:[#allocation7 + $0x20] sm:$0xf]
    %v163 = vld [vmem:[#allocation7 + $0x24] sm:$0xf]
    %v164 = vld [vmem:[#allocation7 + $0x28] sm:$0xf]
    %v165 = vld [vmem:[#allocation7 + $0x2c] sm:$0xf]
    %v166 = vld [vmem:[#allocation7 + $0x30] sm:$0xf]
    %v167 = vld [vmem:[#allocation7 + $0x34] sm:$0xf]
    %v168 = vld [vmem:[#allocation7 + $0x38] sm:$0xf]
    %v169 = vld [vmem:[#allocation7 + $0x3c] sm:$0xf]
    %v170 = vld [vmem:[#allocation7 + $0x40] sm:$0xf]
    %v171 = vld [vmem:[#allocation7 + $0x44] sm:$0xf]
    %v172 = vld [vmem:[#allocation7 + $0x48] sm:$0xf]
    %v173 = vld [vmem:[#allocation7 + $0x4c] sm:$0xf]
    %v174 = vld [vmem:[#allocation7 + $0x50] sm:$0xf]
    %v175 = vld [vmem:[#allocation7 + $0x54] sm:$0xf]
    %v176 = vld [vmem:[#allocation7 + $0x58] sm:$0xf]
    %v177 = vld [vmem:[#allocation7 + $0x5c] sm:$0xf]
    %v178 = vld [vmem:[#allocation7 + $0x60] sm:$0xf]
    %v179 = vld [vmem:[#allocation7 + $0x64] sm:$0xf]
    %v180 = vld [vmem:[#allocation7 + $0x68] sm:$0xf]
    %v181 = vld [vmem:[#allocation7 + $0x6c] sm:$0xf]
    %v182 = vld [vmem:[#allocation7 + $0x70] sm:$0xf]
    %v183 = vld [vmem:[#allocation7 + $0x74] sm:$0xf]
    %v184 = vld [vmem:[#allocation7 + $0x78] sm:$0xf]
    %v185 = vld [vmem:[#allocation7 + $0x7c] sm:$0xf]
    %v186 = vld [vmem:[%s4] sm:$0x1]
    %v188 = vlaneseq
    %v189 = vshrl.u32 %v188, 7
    %v190 = vsub.s32 0, %v189
    %v191 = vrot.slane %v186, %v190
    %v225 = vunpack.c.l.b16 %v154
    %v226 = vunpack.c.l.b16 %v155
    %v227 = vunpack.c.l.b16 %v156
    %v228 = vunpack.c.l.b16 %v157
    %v229 = vunpack.c.l.b16 %v158
    %v230 = vunpack.c.l.b16 %v159
    %v231 = vunpack.c.l.b16 %v160
    %v232 = vunpack.c.l.b16 %v161
    %v233 = vunpack.c.l.b16 %v162
    %v234 = vunpack.c.l.b16 %v163
    %v235 = vunpack.c.l.b16 %v164
    %v236 = vunpack.c.l.b16 %v165
    %v237 = vunpack.c.l.b16 %v166
    %v238 = vunpack.c.l.b16 %v167
    %v239 = vunpack.c.l.b16 %v168
    %v240 = vunpack.c.l.b16 %v169
    %v241 = vunpack.c.l.b16 %v170
    %v242 = vunpack.c.l.b16 %v171
    %v243 = vunpack.c.l.b16 %v172
    %v244 = vunpack.c.l.b16 %v173
    %v245 = vunpack.c.l.b16 %v174
    %v246 = vunpack.c.l.b16 %v175
    %v247 = vunpack.c.l.b16 %v176
    %v248 = vunpack.c.l.b16 %v177
    %v249 = vunpack.c.l.b16 %v178
    %v250 = vunpack.c.l.b16 %v179
    %v251 = vunpack.c.l.b16 %v180
    %v252 = vunpack.c.l.b16 %v181
    %v253 = vunpack.c.l.b16 %v182
    %v254 = vunpack.c.l.b16 %v183
    %v255 = vunpack.c.l.b16 %v184
    %v256 = vunpack.c.l.b16 %v185
    %v257 = vpack.c.b16 %v226, %v225
    %v258 = vpack.c.b16 %v228, %v227
    %v259 = vpack.c.b16 %v230, %v229
    %v260 = vpack.c.b16 %v232, %v231
    %v261 = vpack.c.b16 %v234, %v233
    %v262 = vpack.c.b16 %v236, %v235
    %v263 = vpack.c.b16 %v238, %v237
    %v264 = vpack.c.b16 %v240, %v239
    %v265 = vpack.c.b16 %v242, %v241
    %v266 = vpack.c.b16 %v244, %v243
    %v267 = vpack.c.b16 %v246, %v245
    %v268 = vpack.c.b16 %v248, %v247
    %v269 = vpack.c.b16 %v250, %v249
    %v270 = vpack.c.b16 %v252, %v251
    %v271 = vpack.c.b16 %v254, %v253
    %v272 = vpack.c.b16 %v256, %v255
    %289 = vmatprep.subr.bf16.mxu0 0
    %290 = vmatpush1.bf16.msra.mxu0 %v257
    %291 = vmatprep.subr.bf16.mxu0 0
    %292 = vmatpush1.bf16.msra.mxu0 %v258
    %293 = vmatprep.subr.bf16.mxu0 0
    %294 = vmatpush1.bf16.msra.mxu0 %v259
    %295 = vmatprep.subr.bf16.mxu0 0
    %296 = vmatpush1.bf16.msra.mxu0 %v260
    %297 = vmatprep.subr.bf16.mxu0 0
    %298 = vmatpush1.bf16.msra.mxu0 %v261
    %299 = vmatprep.subr.bf16.mxu0 0
    %300 = vmatpush1.bf16.msra.mxu0 %v262
    %301 = vmatprep.subr.bf16.mxu0 0
    %302 = vmatpush1.bf16.msra.mxu0 %v263
    %303 = vmatprep.subr.bf16.mxu0 0
    %304 = vmatpush1.bf16.msra.mxu0 %v264
    %305 = vmatprep.subr.bf16.mxu0 0
    %306 = vmatpush1.bf16.msra.mxu0 %v265
    %307 = vmatprep.subr.bf16.mxu0 0
    %308 = vmatpush1.bf16.msra.mxu0 %v266
    %309 = vmatprep.subr.bf16.mxu0 0
    %310 = vmatpush1.bf16.msra.mxu0 %v267
    %311 = vmatprep.subr.bf16.mxu0 0
    %312 = vmatpush1.bf16.msra.mxu0 %v268
    %313 = vmatprep.subr.bf16.mxu0 0
    %314 = vmatpush1.bf16.msra.mxu0 %v269
    %315 = vmatprep.subr.bf16.mxu0 0
    %316 = vmatpush1.bf16.msra.mxu0 %v270
    %317 = vmatprep.subr.bf16.mxu0 0
    %318 = vmatpush1.bf16.msra.mxu0 %v271
    %319 = vmatprep.subr.bf16.mxu0 0
    %320 = vmatpush1.bf16.msra.mxu0 %v272
    %321 = vmatprep.mubr.bf16.mxu0 %v153
    %322 = vmatmul.mubr.bf16.gmra.mrb[0].mxu0 %v152
    %v323 = vpop.f32.mrb[0].mxu0
    %v324 = vadd.f32 %v191, %v323
    %v325 = vpop.f32.mrb[0].mxu0
    %v326 = vpop.f32.mrb[0].mxu0
    %v327 = vpop.f32.mrb[0].mxu0
    %328 = vdwg.mxu0
    %v329 = vmax.f32 %v324, 0.0
    %v330 = vld [vmem:[%s5] sm:$0x1]
    %v332 = vlaneseq
    %v333 = vshrl.u32 %v332, 7
    %v334 = vsub.s32 0, %v333
    %v335 = vrot.slane %v330, %v334
    %v337 = vmul.f32 %v329, %v335
    %338 = vadd.xlane.f32.xlu0 %v337
    %v339 = vpop.xlane.xlu0 %338
    %v340 = vld [vmem:[#allocation2] sm:$0x1]
    %v342 = vlaneseq
    %v343 = vshrl.u32 %v342, 7
    %v344 = vsub.s32 0, %v343
    %v345 = vrot.slane %v340, %v344
    %v347 = vadd.f32 %v339, %v345
    %v348 = vmul.f32 %v347, 0.5
    %v349 = vtanh.pop %v348
    %v350 = vadd.f32 %v349, 1.0
    %v351 = vmul.f32 %v350, 0.5
    %vm352 = vcmask 7168
    %353 = vst.msk [vmem:[%s7] sm:$0xff] %vm352, %v351
    // Predicated region
    $region42: #{tpu_custom_call.1} parent=1 // pred_check
      _
    $region43: #{tpu_custom_call.1} parent=1 // pred_check_branch
      %355 = sbr.rel (0) target = $region45
    $region44: #{tpu_custom_call.1} parent=1 // pred_region
      _
    $region45: #{tpu_custom_call.1} parent=1 // pred_fallthru
      _
    // Predicated region
    $region46: #{tpu_custom_call.1} parent=1 // pred_check
      _
    $region47: #{tpu_custom_call.1} parent=1 // pred_check_branch
      %357 = sbr.rel (0) target = $region49
    $region48: #{tpu_custom_call.1} parent=1 // pred_region
      _
    $region49: #{tpu_custom_call.1} parent=1 // pred_fallthru
      _
    %358 = vsyncpa [#allocation4], 1
    %359 = vsyncpa [#allocation6], 1

</llo_original>
